<compile_context>
chip_gen: v6e
topology: v6e:2x2x1
jax: 0.10.0
libtpu: 0.0.40
codegen_flags: <defaults>
</compile_context>

<pallas_src>
import functools

import jax
import jax.numpy as jnp
from jax.experimental import pallas as pl
from jax.experimental.pallas import tpu as pltpu


def _frame_mixup_kernel(noise_ref, feat_ref, out_ref, *, inv_temperature):
    # noise_ref: (Bt, R, S), feat_ref: (Bt, S, F), out_ref: (Bt, R, F)
    logits = noise_ref[...].astype(jnp.float32) * inv_temperature   # mul, not div
    m = jnp.max(logits, axis=-1, keepdims=True)                     # (Bt, R, 1)
    p = jnp.exp(logits - m)                                         # (Bt, R, S)
    denom = jnp.sum(p, axis=-1, keepdims=True)                      # (Bt, R, 1)
    # EUP approximate reciprocal (otherwise-idle slot) instead of exact VPU
    # divide; normalize on the (R, S) side since S <= F here.
    path = p * pl.reciprocal(denom, approx=True)

    feat = feat_ref[...]
    if feat.dtype == jnp.bfloat16:
        # Feed the MXU bf16 x bf16 operands (v6e/v7x native); f32 accumulate.
        lhs = path.astype(jnp.bfloat16)
    else:
        lhs = path
        feat = feat.astype(jnp.float32)

    out = jnp.einsum("brs,bsf->brf", lhs, feat,
                     preferred_element_type=jnp.float32)
    out_ref[...] = out.astype(out_ref.dtype)


def _pick_batch_block(B, R, S, F):
    """Batches per grid step: large enough to amortize ~0.35us/step overhead,
    small enough to fit double-buffered f32 blocks inside every chip's scoped
    VMEM, and leaving >=2 grid steps when B >= 2 (v7x has 2 TensorCores)."""
    per_batch_bytes = 4 * (R * S + S * F + R * F) * 4   # f32, double-buffered + slack
    budget = 8 << 20
    bb = max(1, min(B, budget // max(per_batch_bytes, 1)))
    if B >= 2:
        bb = min(bb, (B + 1) // 2)
    while B % bb:                                        # exact divisor -> no ragged blocks
        bb -= 1
    return bb


def frame_mixup(feature, gaussian_noise, temperature=0.2):
    """feature: (B, S, F), gaussian_noise: (B, R, S) -> (B, R, F)."""
    B, S, F = feature.shape
    B2, R, S2 = gaussian_noise.shape
    assert B2 == B and S2 == S

    bb = _pick_batch_block(B, R, S, F)
    kernel = functools.partial(_frame_mixup_kernel,
                               inv_temperature=1.0 / float(temperature))

    bytes_accessed = (gaussian_noise.size * gaussian_noise.dtype.itemsize
                      + feature.size * feature.dtype.itemsize
                      + B * R * F * feature.dtype.itemsize)
    # Double-buffered f32 blocks + headroom; clamped so it is valid on v5e
    # (16 MiB default scoped) up through v7x (64 MiB physical per TC).
    vmem_limit = int(min(64 << 20,
                         max(16 << 20, 8 * 4 * bb * (R * S + S * F + R * F))))

    # NOTE: output stays (B, R, F); a lane-dense (B, R*F) store was considered
    # but the required in-kernel minor-dim merge reshape is not reliably
    # lowerable for F=32, and at these sizes the kernel is overhead-bound.
    return pl.pallas_call(
        kernel,
        out_shape=jax.ShapeDtypeStruct((B, R, F), feature.dtype),
        grid_spec=pltpu.PrefetchScalarGridSpec(
            num_scalar_prefetch=0,
            grid=(B // bb,),
            in_specs=[
                pl.BlockSpec((bb, R, S), lambda i: (i, 0, 0)),
                pl.BlockSpec((bb, S, F), lambda i: (i, 0, 0)),
            ],
            out_specs=pl.BlockSpec((bb, R, F), lambda i: (i, 0, 0)),
        ),
        compiler_params=pltpu.CompilerParams(
            dimension_semantics=("parallel",),
            vmem_limit_bytes=vmem_limit),
        cost_estimate=pl.CostEstimate(
            flops=2 * B * R * S * F,
            transcendentals=B * R * S,
            bytes_accessed=bytes_accessed),
    )(gaussian_noise, feature)


if __name__ == "__main__":
    # Module config (small, consistent with FrameMixup(seq_len, feat_dim, ...)).
    batch = 2
    seq_len = 16
    feat_dim = 32
    frame_reduction_ratio = 0.5
    reduced_len = max(1, int(seq_len * (1 - frame_reduction_ratio)))  # 8
    temperature = 0.2

    key = jax.random.PRNGKey(0)
    k_feat, k_noise, k_tmpl = jax.random.split(key, 3)

    feature = jax.random.normal(k_feat, (batch, seq_len, feat_dim), jnp.float32)
    # noise_template from __init__ exists but is only used for shape/device in
    # forward; forward draws fresh N(0,1) noise each call — we do the same.
    _noise_template = jax.random.normal(k_tmpl, (1, reduced_len, seq_len), jnp.float32)
    gaussian_noise = jax.random.normal(
        k_noise, (batch, reduced_len, seq_len), jnp.float32)

    out = frame_mixup(feature, gaussian_noise, temperature=temperature)
    out = jax.block_until_ready(out)

    # Reference check (plain JAX). Tolerance relaxed vs 1e-5 because the kernel
    # uses pl.reciprocal(approx=True) (~1e-4 relative error) in the softmax.
    ref_path = jax.nn.softmax(gaussian_noise / temperature, axis=-1)
    ref = jnp.einsum("bij,bjf->bif", ref_path, feature)
    assert out.shape == (batch, reduced_len, feat_dim)
    assert jnp.allclose(out, ref, atol=5e-3, rtol=5e-3), "mismatch vs reference"

    print("KERNEL_OK")
</pallas_src>

<mosaic_0001>
module attributes {stable_mosaic.version = 11 : i64} {
  func.func @_frame_mixup_kernel(%arg0: i32, %arg1: memref<1x8x16xf32, #tpu.memory_space<vmem>>, %arg2: memref<1x16x32xf32, #tpu.memory_space<vmem>>, %arg3: memref<1x8x32xf32, #tpu.memory_space<vmem>>) attributes {dimension_semantics = [#tpu.dimension_semantics<parallel>], iteration_bounds = array<i64: 2>, scalar_prefetch = 0 : i64, scratch_operands = 0 : i64, tpu.core_type = #tpu.core_type<tc>, window_params = [{transform_indices = @transform_0, window_bounds = array<i64: 1, 8, 16>}, {transform_indices = @transform_1, window_bounds = array<i64: 1, 16, 32>}, {transform_indices = @transform_2, window_bounds = array<i64: 1, 8, 32>}]} {
    %c0 = arith.constant 0 : index
    %c0_0 = arith.constant 0 : index
    %c0_1 = arith.constant 0 : index
    %0 = vector.load %arg1[%c0, %c0_0, %c0_1] : memref<1x8x16xf32, #tpu.memory_space<vmem>>, vector<1x8x16xf32>
    %cst = arith.constant 5.000000e+00 : f32
    %1 = vector.broadcast %cst : f32 to vector<1x8x16xf32>
    %2 = arith.mulf %0, %1 : vector<1x8x16xf32>
    %cst_2 = arith.constant dense<0xFF800000> : vector<1x8xf32>
    %3 = vector.multi_reduction <maximumf>, %2, %cst_2 [2] : vector<1x8x16xf32> to vector<1x8xf32>
    %4 = vector.shape_cast %3 : vector<1x8xf32> to vector<1x8x1xf32>
    %5 = vector.broadcast %4 : vector<1x8x1xf32> to vector<1x8x16xf32>
    %6 = arith.subf %2, %5 : vector<1x8x16xf32>
    %7 = math.exp %6 : vector<1x8x16xf32>
    %cst_3 = arith.constant dense<0.000000e+00> : vector<1x8xf32>
    %8 = vector.multi_reduction <add>, %7, %cst_3 [2] : vector<1x8x16xf32> to vector<1x8xf32>
    %9 = vector.shape_cast %8 : vector<1x8xf32> to vector<1x8x1xf32>
    %10 = tpu.reciprocal %9 {approx = true} : vector<1x8x1xf32> -> vector<1x8x1xf32>
    %11 = vector.broadcast %10 : vector<1x8x1xf32> to vector<1x8x16xf32>
    %12 = arith.mulf %7, %11 : vector<1x8x16xf32>
    %c0_4 = arith.constant 0 : index
    %c0_5 = arith.constant 0 : index
    %c0_6 = arith.constant 0 : index
    %13 = vector.load %arg2[%c0_4, %c0_5, %c0_6] : memref<1x16x32xf32, #tpu.memory_space<vmem>>, vector<1x16x32xf32>
    "tpu.trace_start"() <{level = 10 : i32, message = "brs,bsf->brf"}> : () -> ()
    %cst_7 = arith.constant dense<0.000000e+00> : vector<1x8x32xf32>
    %14 = tpu.matmul %12, %13, %cst_7 {dimension_numbers = #tpu.dot_dimension_numbers<[2], [1], [1], [2], [0, 0, 0, 1, 1, 2], [0], [0]>} : vector<1x8x16xf32>, vector<1x16x32xf32>, vector<1x8x32xf32> -> vector<1x8x32xf32>
    "tpu.trace_stop"() : () -> ()
    %c0_8 = arith.constant 0 : index
    %c0_9 = arith.constant 0 : index
    %c0_10 = arith.constant 0 : index
    %15 = vector.load %arg3[%c0_8, %c0_9, %c0_10] : memref<1x8x32xf32, #tpu.memory_space<vmem>>, vector<1x8x32xf32>
    tpu.vector_store %arg3[%c0_8, %c0_9, %c0_10], %14 {strides = array<i32>} : memref<1x8x32xf32, #tpu.memory_space<vmem>>, vector<1x8x32xf32>,
    return
  }
  func.func @transform_0(%arg0: i32) -> (i32, i32, i32) {
    %c0_i32 = arith.constant 0 : i32
    %c0_i32_0 = arith.constant 0 : i32
    %c0_i32_1 = arith.constant 0 : i32
    return %arg0, %c0_i32, %c0_i32_0 : i32, i32, i32
  }
  func.func @transform_1(%arg0: i32) -> (i32, i32, i32) {
    %c0_i32 = arith.constant 0 : i32
    %c0_i32_0 = arith.constant 0 : i32
    %c0_i32_1 = arith.constant 0 : i32
    return %arg0, %c0_i32, %c0_i32_0 : i32, i32, i32
  }
  func.func @transform_2(%arg0: i32) -> (i32, i32, i32) {
    %c0_i32 = arith.constant 0 : i32
    %c0_i32_0 = arith.constant 0 : i32
    %c0_i32_1 = arith.constant 0 : i32
    return %arg0, %c0_i32, %c0_i32_0 : i32, i32, i32
  }
}

</mosaic_0001>

<llo_original>
// kernel: tpu_custom_call.1
$region0: #{tpu_custom_call.1}
  #allocation0 [shape = 'u32[]', space=smem, size = 0x4, offset = 0x4, fixed_abs, tag = 'smem constant byte address 0x4 - core index']
  #allocation1 [shape = 'u32[144,128]{1,0:T(1,128)}', space=vmem, size = 0x12000, scoped, tag = 'internal scratch']
  %s0 = inlined_call_operand.hbm [shape: f32[2,8,16], index: 0, kind: input, shape index: {}]
  %s1 = inlined_call_operand.hbm [shape: f32[2,16,32], index: 1, kind: input, shape index: {}]
  %s2 = inlined_call_operand.hbm [shape: f32[2,8,32], index: 2, kind: output, shape index: {}]
  %s3 = sld [smem:[#allocation0]]
  $region49: #{tpu_custom_call.1} parent=0
    _
  %s5 = ssub.s32 1, %s3
  %s6 = scalar_select 0, %s5, %s3
  $region1: #{tpu_custom_call.1} parent=0
    #allocation2 [shape = 'u8[8192]{0}', space=vmem, size = 0x2000, scoped, tag = 'input window, operand 0']
    #allocation3 [shape = 's32[2]{0}', space=sflag, size = 0x8, scoped, tag = 'scoped memory for tpu_custom_call.1']
    #allocation4 [shape = 's32[2]{0}', space=sflag, size = 0x8, scoped, tag = 'scoped memory for tpu_custom_call.1']
    #allocation5 [shape = 'u8[16384]{0}', space=vmem, size = 0x4000, scoped, tag = 'input window, operand 1']
    #allocation6 [shape = 's32[2]{0}', space=sflag, size = 0x8, scoped, tag = 'scoped memory for tpu_custom_call.1']
    #allocation7 [shape = 'u8[8192]{0}', space=vmem, size = 0x2000, scoped, tag = 'output window, operand 0']
    %7 = vsyncpa [#allocation3], 0
    %s8 = scalar_lea.sflag [#allocation3], 1
    %9 = vsyncpa %s8, 0
    %10 = vsyncpa [#allocation6], 0
    %s11 = scalar_lea.sflag [#allocation6], 1
    %12 = vsyncpa %s11, 0
    %13 = vsyncpa [#allocation4], 0
    %s14 = scalar_lea.sflag [#allocation4], 1
    %15 = vsyncpa %s14, 0
    loop: start=0, step=1, limit=4
    $region2: #{tpu_custom_call.1} parent=1 // loop_pre_header
      _
    $region3: #{tpu_custom_call.1} parent=1 // loop_header
      %s17 = sphi 0, %s21
      %p18 = scmp.ge.s32.totalorder %s17, 4
      %s27 = sphi 0, %s29
      %s30 = sphi 0, %s27
      %s31 = sphi 0, %s30
      %s47 = sphi 0, %s31
      %s53 = sphi 0, %s55
      %s56 = sphi 0, %s53
      %s57 = sphi 0, %s56
      %s73 = sphi 0, %s57
      %s79 = sphi 0, %s81
      %s82 = sphi 0, %s79
      %s83 = sphi 0, %s82
      %s99 = sphi 0, %s83
    $region4: #{tpu_custom_call.1} parent=1 // loop_header_branch
      %20 = sbr.rel (%p18) target = $region8
    $region5: #{tpu_custom_call.1} parent=1 // loop_body
      %s22 = ssub.s32 %s17, 1
      %s23 = ssub.s32 %s17, 2
      %s24 = sadd.s32 %s17, 1
      %s25 = ssub.s32 %s17, %s24
      %p26 = scmp.eq.s32.totalorder %s25, 0
      %s28 = sadd.s32 %s27, 1
      %s29 = scalar_select %p26, %s27, %s28
      %p32 = pneg %p26
      %p33 = scmp.eq.s32.totalorder %s17, 1
      %p34 = por %p32, %p33
      %p35 = scmp.ne.s32.totalorder %s27, %s30
      %p36 = scmp.eq.s32.totalorder %s17, 0
      %p37 = por %p35, %p36
      %p38 = scmp.ne.s32.totalorder %s27, %s30
      %p39 = scmp.eq.s32.totalorder %s22, 1
      %p40 = por %p38, %p39
      %p41 = scmp.ne.s32.totalorder %s30, %s31
      %p42 = scmp.eq.s32.totalorder %s22, 0
      %p43 = por %p41, %p42
      %p44 = scmp.ne.s32.totalorder %s30, %s31
      %p45 = scmp.eq.s32.totalorder %s23, 1
      %p46 = por %p44, %p45
      %p48 = scmp.ne.s32.totalorder %s31, %s47
      %p49 = scmp.eq.s32.totalorder %s23, 0
      %p50 = por %p48, %p49
      %s51 = ssub.s32 %s17, %s24
      %p52 = scmp.eq.s32.totalorder %s51, 0
      %s54 = sadd.s32 %s53, 1
      %s55 = scalar_select %p52, %s53, %s54
      %p58 = pneg %p52
      %p59 = scmp.eq.s32.totalorder %s17, 1
      %p60 = por %p58, %p59
      %p61 = scmp.ne.s32.totalorder %s53, %s56
      %p62 = scmp.eq.s32.totalorder %s17, 0
      %p63 = por %p61, %p62
      %p64 = scmp.ne.s32.totalorder %s53, %s56
      %p65 = scmp.eq.s32.totalorder %s22, 1
      %p66 = por %p64, %p65
      %p67 = scmp.ne.s32.totalorder %s56, %s57
      %p68 = scmp.eq.s32.totalorder %s22, 0
      %p69 = por %p67, %p68
      %p70 = scmp.ne.s32.totalorder %s56, %s57
      %p71 = scmp.eq.s32.totalorder %s23, 1
      %p72 = por %p70, %p71
      %p74 = scmp.ne.s32.totalorder %s57, %s73
      %p75 = scmp.eq.s32.totalorder %s23, 0
      %p76 = por %p74, %p75
      %s77 = ssub.s32 %s17, %s24
      %p78 = scmp.eq.s32.totalorder %s77, 0
      %s80 = sadd.s32 %s79, 1
      %s81 = scalar_select %p78, %s79, %s80
      %p84 = pneg %p78
      %p85 = scmp.eq.s32.totalorder %s17, 1
      %p86 = por %p84, %p85
      %p87 = scmp.ne.s32.totalorder %s79, %s82
      %p88 = scmp.eq.s32.totalorder %s17, 0
      %p89 = por %p87, %p88
      %p90 = scmp.ne.s32.totalorder %s79, %s82
      %p91 = scmp.eq.s32.totalorder %s22, 1
      %p92 = por %p90, %p91
      %p93 = scmp.ne.s32.totalorder %s82, %s83
      %p94 = scmp.eq.s32.totalorder %s22, 0
      %p95 = por %p93, %p94
      %p96 = scmp.ne.s32.totalorder %s82, %s83
      %p97 = scmp.eq.s32.totalorder %s23, 1
      %p98 = por %p96, %p97
      %p100 = scmp.ne.s32.totalorder %s83, %s99
      %p101 = scmp.eq.s32.totalorder %s23, 0
      %p102 = por %p100, %p101
      %p103 = scmp.le.s32.totalorder 1, %s17
      %p104 = scmp.lt.s32.totalorder %s17, 3
      %p105 = pnand %p103, %p104
      %p106 = pneg %p105
      // Predicated region
      $region9: #{tpu_custom_call.1} parent=5 // pred_check
        _
      $region10: #{tpu_custom_call.1} parent=5 // pred_check_branch
        %108 = sbr.rel (%p105) target = $region12
      $region11: #{tpu_custom_call.1} parent=5 // pred_region
        %s109 = ssub.s32 %s17, 1
      $region12: #{tpu_custom_call.1} parent=5 // pred_fallthru
        _
      %p110 = scmp.lt.s32.totalorder %s17, 2
      // Predicated region
      $region13: #{tpu_custom_call.1} parent=5 // pred_check
        %p111 = pneg %p110
      $region14: #{tpu_custom_call.1} parent=5 // pred_check_branch
        %113 = sbr.rel (%p111) target = $region16
      $region15: #{tpu_custom_call.1} parent=5 // pred_region
        // Predicated region
        $region17: #{tpu_custom_call.1} parent=15 // pred_check
          %p114 = pneg %p37
        $region18: #{tpu_custom_call.1} parent=15 // pred_check_branch
          %116 = sbr.rel (%p114) target = $region20
        $region19: #{tpu_custom_call.1} parent=15 // pred_region
          %s117 = sand.u32 %s27, 1
          %s118 = scalar_lea.sflag [#allocation3], %s117
          %s119 = sand.u32 %s27, 1
          %s120 = smul.addr %s119, 8
          %s121 = scalar_lea.vmem [#allocation2], %s120
          %s123 = ssub.s32 128, 128
          %124 = vsyncadd %s118, %s123
          %s125 = smul.addr %s17, 128
          %s126 = scalar_lea.hbm %s0, %s125
          %s128 = sshll.u32 %s121, 4
          %s129 = int_to_ptr.vmem [resolvable:$true] %s128
          %131 = dma.hbm_to_vmem [thread:$0]  %s126, 128, %s129, %s118
        $region20: #{tpu_custom_call.1} parent=15 // pred_fallthru
          _
        // Predicated region
        $region21: #{tpu_custom_call.1} parent=15 // pred_check
          %p132 = pneg %p63
        $region22: #{tpu_custom_call.1} parent=15 // pred_check_branch
          %134 = sbr.rel (%p132) target = $region24
        $region23: #{tpu_custom_call.1} parent=15 // pred_region
          %s135 = sand.u32 %s53, 1
          %s136 = scalar_lea.sflag [#allocation6], %s135
          %s137 = sand.u32 %s53, 1
          %s138 = smul.addr %s137, 16
          %s139 = scalar_lea.vmem [#allocation5], %s138
          %s141 = ssub.s32 256, 256
          %142 = vsyncadd %s136, %s141
          %s143 = smul.addr %s17, 2
          %s144 = smul.addr %s143, 128
          %s145 = scalar_lea.hbm %s1, %s144
          %s146 = sshll.u32 %s139, 4
          %s147 = int_to_ptr.vmem [resolvable:$true] %s146
          %152 = dma.hbm_to_vmem [thread:$0]  %s145, 256, %s147, %s136, 128, 128, 8
        $region24: #{tpu_custom_call.1} parent=15 // pred_fallthru
          _
      $region16: #{tpu_custom_call.1} parent=5 // pred_fallthru
        _
      %p153 = scmp.le.s32.totalorder 1, %s17
      %p154 = scmp.lt.s32.totalorder %s17, 3
      %p155 = pnand %p153, %p154
      %p156 = pneg %p155
      // Predicated region
      $region25: #{tpu_custom_call.1} parent=5 // pred_check
        _
      $region26: #{tpu_custom_call.1} parent=5 // pred_check_branch
        %158 = sbr.rel (%p155) target = $region28
      $region27: #{tpu_custom_call.1} parent=5 // pred_region
        %s159 = ssub.s32 %s17, 1
        %s160 = sand.u32 %s30, 1
        %s161 = scalar_lea.sflag [#allocation3], %s160
        %s162 = sand.u32 %s30, 1
        %s163 = smul.addr %s162, 8
        %s164 = scalar_lea.vmem [#allocation2], %s163
        // Predicated region
        $region29: #{tpu_custom_call.1} parent=27 // pred_check
          %p165 = pneg %p43
        $region30: #{tpu_custom_call.1} parent=27 // pred_check_branch
          %167 = sbr.rel (%p165) target = $region32
        $region31: #{tpu_custom_call.1} parent=27 // pred_region
          %168 = dma.done %s161, 128
        $region32: #{tpu_custom_call.1} parent=27 // pred_fallthru
          _
        %s169 = sand.u32 %s56, 1
        %s170 = scalar_lea.sflag [#allocation6], %s169
        %s171 = sand.u32 %s56, 1
        %s172 = smul.addr %s171, 16
        %s173 = scalar_lea.vmem [#allocation5], %s172
        // Predicated region
        $region33: #{tpu_custom_call.1} parent=27 // pred_check
          %p174 = pneg %p69
        $region34: #{tpu_custom_call.1} parent=27 // pred_check_branch
          %176 = sbr.rel (%p174) target = $region36
        $region35: #{tpu_custom_call.1} parent=27 // pred_region
          %177 = dma.done %s170, 256
        $region36: #{tpu_custom_call.1} parent=27 // pred_fallthru
          _
        %s178 = sand.u32 %s30, 1
        %s179 = scalar_lea.sflag [#allocation3], %s178
        %s180 = sand.u32 %s30, 1
        %s181 = smul.addr %s180, 8
        %s182 = scalar_lea.vmem [#allocation2], %s181
        %p183 = pneg %p43
        %p184 = pneg %p40
        %s185 = sand.u32 %s56, 1
        %s186 = scalar_lea.sflag [#allocation6], %s185
        %s187 = sand.u32 %s56, 1
        %s188 = smul.addr %s187, 16
        %s189 = scalar_lea.vmem [#allocation5], %s188
        %p190 = pneg %p69
        %p191 = pneg %p66
        %p192 = pneg %p95
        %p193 = pneg %p92
        %s194 = sand.u32 %s82, 1
        %s195 = scalar_lea.sflag [#allocation4], %s194
        %s196 = sand.u32 %s82, 1
        %s197 = smul.addr %s196, 8
        %s198 = scalar_lea.vmem [#allocation7], %s197
        %v199 = vld [vmem:[%s164] sm:$0xff]
        %v200 = vmul.f32 %v199, 5.0
        %vm201 = vcmask 130048
        %v202 = vsel %vm201, %v200, -inf
        %203 = vmax.xlane.f32.xlu0 %v202
        %v204 = vpop.xlane.xlu0 %203
        %v205 = vsub.f32 %v200, %v204
        %v206 = vmul.f32 %v205, 1.442695
        %v207 = vpow.pop %v206
        %v208 = vsel %vm201, %v207, 0.0
        %209 = vadd.xlane.f32.xlu0 %v208
        %v210 = vpop.xlane.xlu0 %209
        %v211 = vrcp.pop %v210
        %v212 = vmul.f32 %v207, %v211
        %v213 = vld [vmem:[%s173] sm:$0xff]
        %v214 = vld [vmem:[%s173 + $0x8] sm:$0xff]
        %v216 = vsel %vm201, %v212, 0
        %218 = vmatprep.subr.mxu0 0.0
        %219 = vmatpush1.msra.mxu0 0.0
        %220 = vmatprep.subr.mxu0 0.0
        %221 = vmatpush1.msra.mxu0 0.0
        %222 = vmatprep.subr.mxu0 0.0
        %223 = vmatpush1.msra.mxu0 0.0
        %224 = vmatprep.subr.mxu0 0.0
        %225 = vmatpush1.msra.mxu0 0.0
        %226 = vmatprep.subr.mxu0 0.0
        %227 = vmatpush1.msra.mxu0 0.0
        %228 = vmatprep.subr.mxu0 0.0
        %229 = vmatpush1.msra.mxu0 0.0
        %230 = vmatprep.subr.mxu0 0.0
        %231 = vmatpush1.msra.mxu0 0.0
        %232 = vmatprep.subr.mxu0 0.0
        %233 = vmatpush1.msra.mxu0 0.0
        %234 = vmatprep.subr.mxu0 0.0
        %235 = vmatpush1.msra.mxu0 0.0
        %236 = vmatprep.subr.mxu0 0.0
        %237 = vmatpush1.msra.mxu0 0.0
        %238 = vmatprep.subr.mxu0 0.0
        %239 = vmatpush1.msra.mxu0 0.0
        %240 = vmatprep.subr.mxu0 0.0
        %241 = vmatpush1.msra.mxu0 0.0
        %242 = vmatprep.subr.mxu0 0.0
        %243 = vmatpush1.msra.mxu0 0.0
        %244 = vmatprep.subr.mxu0 0.0
        %245 = vmatpush1.msra.mxu0 0.0
        %246 = vmatprep.subr.mxu0 0.0
        %247 = vmatpush1.msra.mxu0 %v214
        %248 = vmatprep.subr.mxu0 0.0
        %249 = vmatpush1.msra.mxu0 %v213
        %250 = vmatprep.subr.mxu0 0.0
        %251 = vmatpush2.msra.mxu0 0.0
        %252 = vmatprep.subr.mxu0 0.0
        %253 = vmatpush2.msra.mxu0 0.0
        %254 = vmatprep.subr.mxu0 0.0
        %255 = vmatpush2.msra.mxu0 0.0
        %256 = vmatprep.subr.mxu0 0.0
        %257 = vmatpush2.msra.mxu0 0.0
        %258 = vmatprep.subr.mxu0 0.0
        %259 = vmatpush2.msra.mxu0 0.0
        %260 = vmatprep.subr.mxu0 0.0
        %261 = vmatpush2.msra.mxu0 0.0
        %262 = vmatprep.subr.mxu0 0.0
        %263 = vmatpush2.msra.mxu0 0.0
        %264 = vmatprep.subr.mxu0 0.0
        %265 = vmatpush2.msra.mxu0 0.0
        %266 = vmatprep.subr.mxu0 0.0
        %267 = vmatpush2.msra.mxu0 0.0
        %268 = vmatprep.subr.mxu0 0.0
        %269 = vmatpush2.msra.mxu0 0.0
        %270 = vmatprep.subr.mxu0 0.0
        %271 = vmatpush2.msra.mxu0 0.0
        %272 = vmatprep.subr.mxu0 0.0
        %273 = vmatpush2.msra.mxu0 0.0
        %274 = vmatprep.subr.mxu0 0.0
        %275 = vmatpush2.msra.mxu0 0.0
        %276 = vmatprep.subr.mxu0 0.0
        %277 = vmatpush2.msra.mxu0 0.0
        %278 = vmatprep.subr.mxu0 0.0
        %279 = vmatpush2.msra.mxu0 0.0
        %280 = vmatprep.subr.mxu0 0.0
        %281 = vmatpush2.msra.mxu0 0.0
        %282 = vmatprep.mubr.f32.mxu0 0.0
        %283 = vmatmul.mubr.f32.gmra.mxu0 %v216
        %v284 = vpop.f32.mrf.mxu0
        %v285 = vadd.f32 0.0, %v284
        %v286 = vpop.f32.mrf.mxu0
        %287 = vdwg.mxu0
        %vm288 = vcmask 261120
        %289 = vst.msk [vmem:[%s198] sm:$0xff] %vm288, %v285
        %s290 = sand.u32 %s82, 1
        %s291 = scalar_lea.sflag [#allocation4], %s290
        %s292 = sand.u32 %s82, 1
        %s293 = smul.addr %s292, 8
        %s294 = scalar_lea.vmem [#allocation7], %s293
        // Predicated region
        $region37: #{tpu_custom_call.1} parent=27 // pred_check
          %p295 = pneg %p92
        $region38: #{tpu_custom_call.1} parent=27 // pred_check_branch
          %297 = sbr.rel (%p295) target = $region40
        $region39: #{tpu_custom_call.1} parent=27 // pred_region
          %s299 = ssub.s32 128, 128
          %300 = vsyncadd %s291, %s299
          %s301 = smul.addr %s22, 128
          %s302 = scalar_lea.hbm %s2, %s301
          %s304 = sshll.u32 %s294, 4
          %s305 = int_to_ptr.vmem [resolvable:$true] %s304
          %307 = dma.vmem_to_hbm [thread:$0]  %s305, 128, %s302, %s291
        $region40: #{tpu_custom_call.1} parent=27 // pred_fallthru
          _
      $region28: #{tpu_custom_call.1} parent=5 // pred_fallthru
        _
      %p308 = scmp.le.s32.totalorder 2, %s17
      // Predicated region
      $region41: #{tpu_custom_call.1} parent=5 // pred_check
        %p309 = pneg %p308
      $region42: #{tpu_custom_call.1} parent=5 // pred_check_branch
        %311 = sbr.rel (%p309) target = $region44
      $region43: #{tpu_custom_call.1} parent=5 // pred_region
        %s312 = ssub.s32 %s17, 2
        // Predicated region
        $region45: #{tpu_custom_call.1} parent=43 // pred_check
          %p313 = pneg %p98
        $region46: #{tpu_custom_call.1} parent=43 // pred_check_branch
          %315 = sbr.rel (%p313) target = $region48
        $region47: #{tpu_custom_call.1} parent=43 // pred_region
          %s316 = sand.u32 %s83, 1
          %s317 = scalar_lea.sflag [#allocation4], %s316
          %s318 = sand.u32 %s83, 1
          %s319 = smul.addr %s318, 8
          %s320 = scalar_lea.vmem [#allocation7], %s319
          %321 = dma.done %s317, 128
        $region48: #{tpu_custom_call.1} parent=43 // pred_fallthru
          _
      $region44: #{tpu_custom_call.1} parent=5 // pred_fallthru
        _
    $region6: #{tpu_custom_call.1} parent=1 // loop_footer
      %s21 = sadd.s32 1, %s17
    $region7: #{tpu_custom_call.1} parent=1 // loop_footer_branch
      %16 = sbr.rel target = $region3
    $region8: #{tpu_custom_call.1} parent=1 // loop_exit
      _
    %322 = vsyncpa [#allocation3], 1
    %s323 = scalar_lea.sflag [#allocation3], 1
    %324 = vsyncpa %s323, 1
    %325 = vsyncpa [#allocation6], 1
    %s326 = scalar_lea.sflag [#allocation6], 1
    %327 = vsyncpa %s326, 1
    %328 = vsyncpa [#allocation4], 1
    %s329 = scalar_lea.sflag [#allocation4], 1
    %330 = vsyncpa %s329, 1

</llo_original>
